<compile_context>
chip_gen: v7x
topology: tpu7x:2x2x1
jax: 0.10.0
libtpu: 0.0.40
codegen_flags: <defaults>
</compile_context>

<pallas_src>
import functools
import math

import jax
import jax.numpy as jnp
from jax import lax
from jax.experimental import pallas as pl
from jax.experimental.pallas import tpu as pltpu

# ---- synthetic, deterministic "cfg" values (shapes/semantics from __init__) ----
ELE_NAME = ("O", "H")                  # cfg.DATA.ELE_NAME -> len == 2
REDUCTION = "mean"                     # cfg.TRAIN.CRITERION.REDUCTION
POS_WEIGHT = 2.0                       # cfg.TRAIN.CRITERION.POS_WEIGHT
WEIGHT_CONFIDENCE = 1.0                # cfg.TRAIN.CRITERION.WEIGHT_CONFIDENCE
WEIGHT_OFFSET_XY = 0.5                 # cfg.TRAIN.CRITERION.WEIGHT_OFFSET_XY
WEIGHT_OFFSET_Z = 0.5                  # cfg.TRAIN.CRITERION.WEIGHT_OFFSET_Z
DECAY_PARAS = (1.0, 0.5, 0.25, 0.125)  # registered buffer; only used by loss_local

_LANES = 128
_LN2 = math.log(2.0)


def _criterion_kernel(p_ref, t_ref, o_ref, *, pos_weight):
    s = pl.program_id(1)               # inner ("arbitrary") streaming step

    @pl.when(s == 0)
    def _init():
        o_ref[...] = jnp.zeros_like(o_ref)

    p = p_ref[...].astype(jnp.float32)           # (block_rows, 128)
    t = t_ref[...].astype(jnp.float32)

    # BCEWithLogits(pos_weight): pw*t*softplus(-p) + (1-t)*softplus(p)
    #                          = (pw*t + 1 - t)*softplus(-p) + (1-t)*p
    sp_neg = jnp.maximum(-p, 0.0) + jnp.log1p(jnp.exp(-jnp.abs(p)))
    bce = (pos_weight * t + (1.0 - t)) * sp_neg + (1.0 - t) * p

    # Row-selection indicator: target confidence (> 0.5) lives on lanes with
    # lane % 4 == 3. `sel` is nonzero only on those lanes; padded groups are
    # all-zero (t == 0), so they never select.
    lane1 = lax.broadcasted_iota(jnp.int32, (1, _LANES), 1)   # (1,128), broadcast rows
    conf1 = (lane1 % 4) == 3
    sel = jnp.where(conf1 & (t > 0.5), 1.0, 0.0)              # (block_rows, 128)

    # Broadcast each conf-lane indicator to its 4-lane group with three XLU lane
    # rotations: rowmask[i] = sel[i] + sel[i+1] + sel[i+2] + sel[i+3] (mod 128).
    # Exact 0/1 since sel is nonzero only on ch==3 lanes; the wrap only touches
    # ch 0..2 lanes of the same row, which are always zero in sel.
    rowmask = (sel
               + pltpu.roll(sel, _LANES - 1, 1)
               + pltpu.roll(sel, _LANES - 2, 1)
               + pltpu.roll(sel, _LANES - 3, 1))

    d = p - t
    sq = d * d * rowmask                                      # masked squared error

    # Per-lane partial sums; channel selection is deferred to the wrapper
    # (the axis=0 reduction preserves lane identity).
    o_ref[0:1, :] += jnp.sum(bce, axis=0, keepdims=True)      # raw BCE (all lanes)
    o_ref[1:2, :] += jnp.sum(sq, axis=0, keepdims=True)       # masked SSE (all lanes)
    o_ref[2:3, :] += jnp.sum(sel, axis=0, keepdims=True)      # selected-row count


def _tensorcore_splits():
    """2-way outer split only on v7x (2 TensorCores/chip); 1 elsewhere."""
    try:
        kind = jax.devices()[0].device_kind.lower()
    except Exception:
        return 1
    return 2 if "v7" in kind else 1


def criterion_forward(predictions, targets):
    """JAX wrapper mirroring Criterion.forward; returns a shape-(1,) float32 loss."""
    assert predictions.shape == targets.shape, (
        f"prediction shape {predictions.shape} doesn't match {targets.shape}")
    n_ele = len(ELE_NAME)
    n = math.prod(predictions.shape)
    assert n % (4 * n_ele) == 0
    n_rows = n // 4                                 # (sample, element) rows

    itemsize = jnp.dtype(predictions.dtype).itemsize
    sub_align = max(8, 32 // itemsize)              # (8,128) f32 / (16,128) bf16 tiles

    n_split = _tensorcore_splits()
    total_rows = pl.cdiv(n, _LANES)                 # 128-lane rows of the flat stream
    rows_per_split = pl.cdiv(total_rows, n_split)
    block_rows = min(2048, sub_align * pl.cdiv(rows_per_split, sub_align))
    steps = pl.cdiv(total_rows, n_split * block_rows)
    padded_rows = n_split * steps * block_rows
    pad = padded_rows * _LANES - n                  # always a multiple of 4 (n % 8 == 0)

    p_flat = predictions.reshape(-1)
    t_flat = targets.reshape(-1)
    if pad:
        p_flat = jnp.pad(p_flat, (0, pad))
        t_flat = jnp.pad(t_flat, (0, pad))
    p2 = p_flat.reshape(padded_rows, _LANES)
    t2 = t_flat.reshape(padded_rows, _LANES)

    kernel = functools.partial(_criterion_kernel, pos_weight=float(POS_WEIGHT))

    cost = pl.CostEstimate(
        flops=20 * n,
        transcendentals=2 * n,
        bytes_accessed=2 * padded_rows * _LANES * itemsize + n_split * 8 * _LANES * 4,
    )

    partials = pl.pallas_call(
        kernel,
        out_shape=jax.ShapeDtypeStruct((n_split, 8, _LANES), jnp.float32),
        grid_spec=pltpu.PrefetchScalarGridSpec(
            num_scalar_prefetch=0,
            grid=(n_split, steps),
            in_specs=[
                pl.BlockSpec((block_rows, _LANES), lambda c, s: (c * steps + s, 0)),
                pl.BlockSpec((block_rows, _LANES), lambda c, s: (c * steps + s, 0)),
            ],
            out_specs=pl.BlockSpec((None, 8, _LANES), lambda c, s: (c, 0, 0)),
        ),
        compiler_params=pltpu.CompilerParams(
            dimension_semantics=("parallel", "arbitrary")),
        cost_estimate=cost,
    )(p2, t2)

    # Tiny final combine (n_split * 4 KiB of partials) in plain JAX; channel is
    # a pure function of lane index (lane % 4) since 128 % 4 == 0.
    lanes = jnp.sum(partials, axis=0)               # (8, 128): bce, sq, sel, 0...
    ch = jnp.arange(_LANES, dtype=jnp.int32) % 4
    bce_lane, sq_lane, sel_lane = lanes[0], lanes[1], lanes[2]
    # Padding is group-aligned and zero-filled: each padded conf element adds
    # exactly softplus(0) = ln2 to the raw BCE sum -> subtract a scalar instead
    # of masking per element in the kernel.
    bce_conf = (jnp.sum(jnp.where(ch == 3, bce_lane, 0.0))
                - jnp.float32((pad // 4) * _LN2))
    xy_sum = jnp.sum(jnp.where(ch < 2, sq_lane, 0.0))
    z_sum = jnp.sum(jnp.where(ch == 2, sq_lane, 0.0))
    cnt = jnp.sum(sel_lane)
    # NOTE: cnt == 0 yields nan, matching torch's MSELoss('mean') over an empty selection.
    loss = (WEIGHT_CONFIDENCE * bce_conf / jnp.float32(n_rows)
            + WEIGHT_OFFSET_XY * xy_sum / (2.0 * cnt)
            + WEIGHT_OFFSET_Z * z_sum / cnt)
    return loss.reshape(1)


def _criterion_ref(predictions, targets):
    """Pure-JAX reference of Criterion.forward for correctness checking."""
    n_ele = len(ELE_NAME)
    p = predictions.reshape(-1, n_ele, 4).astype(jnp.float32)
    t = targets.reshape(-1, n_ele, 4).astype(jnp.float32)
    x, y = p[..., 3], t[..., 3]
    sp = jax.nn.softplus
    bce = POS_WEIGHT * y * sp(-x) + (1.0 - y) * sp(x)
    loss_conf = bce.mean() * WEIGHT_CONFIDENCE
    mask = (t[..., 3] > 0.5).astype(jnp.float32)
    cnt = mask.sum()
    sum_xy = (((p[..., :2] - t[..., :2]) ** 2) * mask[..., None]).sum()
    sum_z = (((p[..., 2] - t[..., 2]) ** 2) * mask).sum()
    return (loss_conf
            + WEIGHT_OFFSET_XY * sum_xy / (2.0 * cnt)
            + WEIGHT_OFFSET_Z * sum_z / cnt)


if __name__ == "__main__":
    key = jax.random.PRNGKey(0)
    kp, kt = jax.random.split(key)
    # any shape whose element count is divisible by len(ELE_NAME)*4 = 8 works;
    # (2, 4, 16, 16) -> 2048 elements -> 512 flattened (sample, element) rows.
    predictions = jax.random.normal(kp, (2, 4, 16, 16), dtype=jnp.float32)
    targets = jax.random.uniform(kt, (2, 4, 16, 16), dtype=jnp.float32)

    loss = criterion_forward(predictions, targets)
    loss = jax.block_until_ready(loss)

    ref = _criterion_ref(predictions, targets)
    assert loss.shape == (1,)
    assert jnp.allclose(loss[0], ref, rtol=1e-5, atol=1e-6), (loss, ref)

    print("KERNEL_OK")
</pallas_src>

<mosaic_0001>
module attributes {stable_mosaic.version = 11 : i64} {
  func.func @_criterion_kernel(%arg0: i32, %arg1: i32, %arg2: memref<16x128xf32, #tpu.memory_space<vmem>>, %arg3: memref<16x128xf32, #tpu.memory_space<vmem>>, %arg4: memref<1x8x128xf32, #tpu.memory_space<vmem>>) attributes {dimension_semantics = [#tpu.dimension_semantics<parallel>, #tpu.dimension_semantics<arbitrary>], iteration_bounds = array<i64: 1, 1>, scalar_prefetch = 0 : i64, scratch_operands = 0 : i64, tpu.core_type = #tpu.core_type<tc>, window_params = [{transform_indices = @transform_0, window_bounds = array<i64: 16, 128>}, {transform_indices = @transform_1, window_bounds = array<i64: 16, 128>}, {transform_indices = @transform_2, window_bounds = array<i64: 1, 8, 128>}]} {
    %c0_i32 = arith.constant 0 : i32
    %0 = arith.cmpi eq, %arg1, %c0_i32 : i32
    %1 = arith.extui %0 : i1 to i32
    %c0_i32_0 = arith.constant 0 : i32
    %2 = arith.cmpi ne, %1, %c0_i32_0 : i32
    scf.if %2 {
      %cst_35 = arith.constant 0.000000e+00 : f32
      %84 = vector.broadcast %cst_35 : f32 to vector<8x128xf32>
      %c0_36 = arith.constant 0 : index
      %c0_37 = arith.constant 0 : index
      %c0_38 = arith.constant 0 : index
      %85 = vector.load %arg4[%c0_36, %c0_37, %c0_38] : memref<1x8x128xf32, #tpu.memory_space<vmem>>, vector<1x8x128xf32>
      %86 = vector.shape_cast %85 : vector<1x8x128xf32> to vector<8x128xf32>
      %87 = vector.shape_cast %84 : vector<8x128xf32> to vector<1x8x128xf32>
      tpu.vector_store %arg4[%c0_36, %c0_37, %c0_38], %87 {strides = array<i32>} : memref<1x8x128xf32, #tpu.memory_space<vmem>>, vector<1x8x128xf32>,
    } else {
    }
    %c0 = arith.constant 0 : index
    %c0_1 = arith.constant 0 : index
    %3 = vector.load %arg2[%c0, %c0_1] : memref<16x128xf32, #tpu.memory_space<vmem>>, vector<16x128xf32>
    %c0_2 = arith.constant 0 : index
    %c0_3 = arith.constant 0 : index
    %4 = vector.load %arg3[%c0_2, %c0_3] : memref<16x128xf32, #tpu.memory_space<vmem>>, vector<16x128xf32>
    %cst = arith.constant 0.000000e+00 : f32
    %5 = vector.broadcast %cst : f32 to vector<16x128xf32>
    %6 = arith.subf %5, %3 : vector<16x128xf32>
    %cst_4 = arith.constant 0.000000e+00 : f32
    %7 = vector.broadcast %cst_4 : f32 to vector<16x128xf32>
    %8 = arith.maximumf %6, %7 : vector<16x128xf32>
    %9 = math.absf %3 : vector<16x128xf32>
    %cst_5 = arith.constant 0.000000e+00 : f32
    %10 = vector.broadcast %cst_5 : f32 to vector<16x128xf32>
    %11 = arith.subf %10, %9 : vector<16x128xf32>
    %12 = math.exp %11 : vector<16x128xf32>
    %13 = math.log1p %12 : vector<16x128xf32>
    %14 = arith.addf %8, %13 : vector<16x128xf32>
    %cst_6 = arith.constant 2.000000e+00 : f32
    %15 = vector.broadcast %cst_6 : f32 to vector<16x128xf32>
    %16 = arith.mulf %15, %4 : vector<16x128xf32>
    %cst_7 = arith.constant 1.000000e+00 : f32
    %17 = vector.broadcast %cst_7 : f32 to vector<16x128xf32>
    %18 = arith.subf %17, %4 : vector<16x128xf32>
    %19 = arith.addf %16, %18 : vector<16x128xf32>
    %20 = arith.mulf %19, %14 : vector<16x128xf32>
    %cst_8 = arith.constant 1.000000e+00 : f32
    %21 = vector.broadcast %cst_8 : f32 to vector<16x128xf32>
    %22 = arith.subf %21, %4 : vector<16x128xf32>
    %23 = arith.mulf %22, %3 : vector<16x128xf32>
    %24 = arith.addf %20, %23 : vector<16x128xf32>
    %25 = tpu.iota {dimensions = array<i32: 1>} : vector<1x128xi32>
    %c4_i32 = arith.constant 4 : i32
    %c0_i32_9 = arith.constant 0 : i32
    %26 = arith.cmpi eq, %c4_i32, %c0_i32_9 : i32
    %c1_i32 = arith.constant 1 : i32
    %27 = arith.select %26, %c1_i32, %c4_i32 : i32
    %28 = vector.broadcast %27 : i32 to vector<1x128xi32>
    %29 = arith.remsi %25, %28 : vector<1x128xi32>
    %c0_i32_10 = arith.constant 0 : i32
    %30 = vector.broadcast %c0_i32_10 : i32 to vector<1x128xi32>
    %31 = arith.cmpi ne, %29, %30 : vector<1x128xi32>
    %c0_i32_11 = arith.constant 0 : i32
    %32 = vector.broadcast %c0_i32_11 : i32 to vector<1x128xi32>
    %33 = arith.cmpi slt, %29, %32 : vector<1x128xi32>
    %c0_i32_12 = arith.constant 0 : i32
    %34 = arith.cmpi slt, %27, %c0_i32_12 : i32
    %35 = vector.broadcast %34 : i1 to vector<1x128xi1>
    %36 = vector.broadcast %35 : vector<1x128xi1> to vector<1x128xi1>
    %37 = arith.xori %33, %36 : vector<1x128xi1>
    %38 = arith.andi %37, %31 : vector<1x128xi1>
    %39 = vector.broadcast %27 : i32 to vector<1x128xi32>
    %40 = arith.addi %29, %39 : vector<1x128xi32>
    %41 = arith.select %38, %40, %29 : vector<1x128xi1>, vector<1x128xi32>
    %c3_i32 = arith.constant 3 : i32
    %42 = vector.broadcast %c3_i32 : i32 to vector<1x128xi32>
    %43 = arith.cmpi eq, %41, %42 : vector<1x128xi32>
    %cst_13 = arith.constant 5.000000e-01 : f32
    %44 = vector.broadcast %cst_13 : f32 to vector<16x128xf32>
    %45 = arith.cmpf ogt, %4, %44 : vector<16x128xf32>
    %46 = vector.broadcast %43 : vector<1x128xi1> to vector<16x128xi1>
    %47 = arith.andi %46, %45 : vector<16x128xi1>
    %cst_14 = arith.constant 1.000000e+00 : f32
    %cst_15 = arith.constant 0.000000e+00 : f32
    %48 = vector.broadcast %cst_14 : f32 to vector<16x128xf32>
    %49 = vector.broadcast %cst_15 : f32 to vector<16x128xf32>
    %50 = arith.select %47, %48, %49 : vector<16x128xi1>, vector<16x128xf32>
    %c127_i32 = arith.constant 127 : i32
    %51 = tpu.dynamic_rotate %50 by %c127_i32 dim 1 : vector<16x128xf32>, i32 -> vector<16x128xf32>
    %52 = arith.addf %50, %51 : vector<16x128xf32>
    %c126_i32 = arith.constant 126 : i32
    %53 = tpu.dynamic_rotate %50 by %c126_i32 dim 1 : vector<16x128xf32>, i32 -> vector<16x128xf32>
    %54 = arith.addf %52, %53 : vector<16x128xf32>
    %c125_i32 = arith.constant 125 : i32
    %55 = tpu.dynamic_rotate %50 by %c125_i32 dim 1 : vector<16x128xf32>, i32 -> vector<16x128xf32>
    %56 = arith.addf %54, %55 : vector<16x128xf32>
    %57 = arith.subf %3, %4 : vector<16x128xf32>
    %58 = arith.mulf %57, %57 : vector<16x128xf32>
    %59 = arith.mulf %58, %56 : vector<16x128xf32>
    %c0_16 = arith.constant 0 : index
    %c0_17 = arith.constant 0 : index
    %c0_18 = arith.constant 0 : index
    %60 = vector.load %arg4[%c0_16, %c0_17, %c0_18] : memref<1x8x128xf32, #tpu.memory_space<vmem>>, vector<1x1x128xf32>
    %61 = vector.shape_cast %60 : vector<1x1x128xf32> to vector<1x128xf32>
    %cst_19 = arith.constant dense<0.000000e+00> : vector<128xf32>
    %62 = vector.multi_reduction <add>, %24, %cst_19 [0] : vector<16x128xf32> to vector<128xf32>
    %63 = vector.shape_cast %62 : vector<128xf32> to vector<1x128xf32>
    %64 = arith.addf %61, %63 : vector<1x128xf32>
    %c0_20 = arith.constant 0 : index
    %c0_21 = arith.constant 0 : index
    %c0_22 = arith.constant 0 : index
    %65 = vector.load %arg4[%c0_20, %c0_21, %c0_22] : memref<1x8x128xf32, #tpu.memory_space<vmem>>, vector<1x1x128xf32>
    %66 = vector.shape_cast %65 : vector<1x1x128xf32> to vector<1x128xf32>
    %67 = vector.shape_cast %64 : vector<1x128xf32> to vector<1x1x128xf32>
    tpu.vector_store %arg4[%c0_20, %c0_21, %c0_22], %67 {strides = array<i32>} : memref<1x8x128xf32, #tpu.memory_space<vmem>>, vector<1x1x128xf32>,
    %c0_23 = arith.constant 0 : index
    %c1 = arith.constant 1 : index
    %c0_24 = arith.constant 0 : index
    %68 = vector.load %arg4[%c0_23, %c1, %c0_24] : memref<1x8x128xf32, #tpu.memory_space<vmem>>, vector<1x1x128xf32>
    %69 = vector.shape_cast %68 : vector<1x1x128xf32> to vector<1x128xf32>
    %cst_25 = arith.constant dense<0.000000e+00> : vector<128xf32>
    %70 = vector.multi_reduction <add>, %59, %cst_25 [0] : vector<16x128xf32> to vector<128xf32>
    %71 = vector.shape_cast %70 : vector<128xf32> to vector<1x128xf32>
    %72 = arith.addf %69, %71 : vector<1x128xf32>
    %c0_26 = arith.constant 0 : index
    %c1_27 = arith.constant 1 : index
    %c0_28 = arith.constant 0 : index
    %73 = vector.load %arg4[%c0_26, %c1_27, %c0_28] : memref<1x8x128xf32, #tpu.memory_space<vmem>>, vector<1x1x128xf32>
    %74 = vector.shape_cast %73 : vector<1x1x128xf32> to vector<1x128xf32>
    %75 = vector.shape_cast %72 : vector<1x128xf32> to vector<1x1x128xf32>
    tpu.vector_store %arg4[%c0_26, %c1_27, %c0_28], %75 {strides = array<i32>} : memref<1x8x128xf32, #tpu.memory_space<vmem>>, vector<1x1x128xf32>,
    %c0_29 = arith.constant 0 : index
    %c2 = arith.constant 2 : index
    %c0_30 = arith.constant 0 : index
    %76 = vector.load %arg4[%c0_29, %c2, %c0_30] : memref<1x8x128xf32, #tpu.memory_space<vmem>>, vector<1x1x128xf32>
    %77 = vector.shape_cast %76 : vector<1x1x128xf32> to vector<1x128xf32>
    %cst_31 = arith.constant dense<0.000000e+00> : vector<128xf32>
    %78 = vector.multi_reduction <add>, %50, %cst_31 [0] : vector<16x128xf32> to vector<128xf32>
    %79 = vector.shape_cast %78 : vector<128xf32> to vector<1x128xf32>
    %80 = arith.addf %77, %79 : vector<1x128xf32>
    %c0_32 = arith.constant 0 : index
    %c2_33 = arith.constant 2 : index
    %c0_34 = arith.constant 0 : index
    %81 = vector.load %arg4[%c0_32, %c2_33, %c0_34] : memref<1x8x128xf32, #tpu.memory_space<vmem>>, vector<1x1x128xf32>
    %82 = vector.shape_cast %81 : vector<1x1x128xf32> to vector<1x128xf32>
    %83 = vector.shape_cast %80 : vector<1x128xf32> to vector<1x1x128xf32>
    tpu.vector_store %arg4[%c0_32, %c2_33, %c0_34], %83 {strides = array<i32>} : memref<1x8x128xf32, #tpu.memory_space<vmem>>, vector<1x1x128xf32>,
    return
  }
  func.func @transform_0(%arg0: i32, %arg1: i32) -> (i32, i32) {
    %c1_i32 = arith.constant 1 : i32
    %0 = arith.muli %arg0, %c1_i32 : i32
    %1 = arith.addi %0, %arg1 : i32
    %c0_i32 = arith.constant 0 : i32
    %c0_i32_0 = arith.constant 0 : i32
    return %1, %c0_i32 : i32, i32
  }
  func.func @transform_1(%arg0: i32, %arg1: i32) -> (i32, i32) {
    %c1_i32 = arith.constant 1 : i32
    %0 = arith.muli %arg0, %c1_i32 : i32
    %1 = arith.addi %0, %arg1 : i32
    %c0_i32 = arith.constant 0 : i32
    %c0_i32_0 = arith.constant 0 : i32
    return %1, %c0_i32 : i32, i32
  }
  func.func @transform_2(%arg0: i32, %arg1: i32) -> (i32, i32, i32) {
    %c0_i32 = arith.constant 0 : i32
    %c0_i32_0 = arith.constant 0 : i32
    %c0_i32_1 = arith.constant 0 : i32
    return %arg0, %c0_i32, %c0_i32_0 : i32, i32, i32
  }
}

</mosaic_0001>

<llo_original>
// kernel: tpu_custom_call.1
$region0: #{tpu_custom_call.1}
  #allocation0 [shape = 'u32[]', space=smem, size = 0x4, offset = 0x4, fixed_abs, tag = 'smem constant byte address 0x4 - core index']
  #allocation1 [shape = 'u32[144,128]{1,0:T(1,128)}', space=vmem, size = 0x12000, scoped, tag = 'internal scratch']
  %s0 = inlined_call_operand.hbm [shape: f32[16,128], index: 0, kind: input, shape index: {}]
  %s1 = inlined_call_operand.hbm [shape: f32[16,128], index: 1, kind: input, shape index: {}]
  %s2 = inlined_call_operand.hbm [shape: f32[1,8,128], index: 2, kind: output, shape index: {}]
  %s3 = sld [smem:[#allocation0]]
  $region30: #{tpu_custom_call.1} parent=0
    _
  %s5 = ssub.s32 1, %s3
  %s6 = scalar_select 0, %s5, %s3
  $region1: #{tpu_custom_call.1} parent=0
    #allocation2 [shape = 'u8[8192]{0}', space=vmem, size = 0x2000, scoped, tag = 'input window, operand 0, single buffered']
    #allocation3 [shape = 's32[1]{0}', space=sflag, size = 0x4, scoped, tag = 'scoped memory for tpu_custom_call.1']
    #allocation4 [shape = 's32[1]{0}', space=sflag, size = 0x4, scoped, tag = 'scoped memory for tpu_custom_call.1']
    #allocation5 [shape = 'u8[8192]{0}', space=vmem, size = 0x2000, scoped, tag = 'input window, operand 1, single buffered']
    #allocation6 [shape = 's32[1]{0}', space=sflag, size = 0x4, scoped, tag = 'scoped memory for tpu_custom_call.1']
    #allocation7 [shape = 'u8[4096]{0}', space=vmem, size = 0x1000, scoped, tag = 'output window, operand 0, single buffered']
    %7 = vsyncpa [#allocation3], 0
    %8 = vsyncpa [#allocation6], 0
    %9 = vsyncpa [#allocation4], 0
    // Predicated region
    $region2: #{tpu_custom_call.1} parent=1 // pred_check
      _
    $region3: #{tpu_custom_call.1} parent=1 // pred_check_branch
      %11 = sbr.rel (0) target = $region5
    $region4: #{tpu_custom_call.1} parent=1 // pred_region
      %s12 = sadd.s32 0, 0
      %s13 = smul.u32 2, %s12
      %s15 = ssub.s32 256, 256
      %16 = vsyncadd [#allocation3], %s15
      %s17 = smul.addr %s13, 128
      %s18 = scalar_lea.hbm %s0, %s17
      %s19 = sshll.u32 [#allocation2], 4
      %s20 = int_to_ptr.vmem [resolvable:$true] %s19
      %25 = dma.hbm_to_vmem [thread:$0]  %s18, 256, %s20, [#allocation3], 128, 128, 8
    $region5: #{tpu_custom_call.1} parent=1 // pred_fallthru
      _
    // Predicated region
    $region6: #{tpu_custom_call.1} parent=1 // pred_check
      _
    $region7: #{tpu_custom_call.1} parent=1 // pred_check_branch
      %27 = sbr.rel (0) target = $region9
    $region8: #{tpu_custom_call.1} parent=1 // pred_region
      %s28 = sadd.s32 0, 0
      %s29 = smul.u32 2, %s28
      %s31 = ssub.s32 256, 256
      %32 = vsyncadd [#allocation6], %s31
      %s33 = smul.addr %s29, 128
      %s34 = scalar_lea.hbm %s1, %s33
      %s35 = sshll.u32 [#allocation5], 4
      %s36 = int_to_ptr.vmem [resolvable:$true] %s35
      %41 = dma.hbm_to_vmem [thread:$0]  %s34, 256, %s36, [#allocation6], 128, 128, 8
    $region9: #{tpu_custom_call.1} parent=1 // pred_fallthru
      _
    // Predicated region
    $region10: #{tpu_custom_call.1} parent=1 // pred_check
      _
    $region11: #{tpu_custom_call.1} parent=1 // pred_check_branch
      %43 = sbr.rel (0) target = $region13
    $region12: #{tpu_custom_call.1} parent=1 // pred_region
      %44 = dma.done [#allocation3], 256
    $region13: #{tpu_custom_call.1} parent=1 // pred_fallthru
      _
    // Predicated region
    $region14: #{tpu_custom_call.1} parent=1 // pred_check
      _
    $region15: #{tpu_custom_call.1} parent=1 // pred_check_branch
      %46 = sbr.rel (0) target = $region17
    $region16: #{tpu_custom_call.1} parent=1 // pred_region
      %47 = dma.done [#allocation6], 256
    $region17: #{tpu_custom_call.1} parent=1 // pred_fallthru
      _
    %s48 = sadd.s32 0, 0
    %s49 = smul.u32 2, %s48
    %s50 = sadd.s32 0, 0
    %s51 = smul.u32 2, %s50
    %p52 = scmp.eq.s32.totalorder 0, 0
    // Predicated region
    $region18: #{tpu_custom_call.1} parent=1 // pred_check
      %p53 = pneg %p52
    $region19: #{tpu_custom_call.1} parent=1 // pred_check_branch
      %55 = sbr.rel (%p53) target = $region21
    $region20: #{tpu_custom_call.1} parent=1 // pred_region
      %56 = vst [vmem:[#allocation7] sm:$0xff] 0.0
    $region21: #{tpu_custom_call.1} parent=1 // pred_fallthru
      _
    %v57 = vld [vmem:[#allocation2] sm:$0xff]
    %v58 = vld [vmem:[#allocation2 + $0x8] sm:$0xff]
    %v59 = vld [vmem:[#allocation5] sm:$0xff]
    %v60 = vld [vmem:[#allocation5 + $0x8] sm:$0xff]
    %v61 = vsub.f32 0.0, %v57
    %v62 = vsub.f32 0.0, %v58
    %v63 = vmax.f32 %v61, 0.0
    %v64 = vmax.f32 %v62, 0.0
    %v65 = vand.u32 2147483647, %v57
    %v66 = vand.u32 2147483647, %v58
    %v67 = vsub.f32 0.0, %v65
    %v68 = vsub.f32 0.0, %v66
    %v69 = vmul.f32 %v67, 1.442695
    %v70 = vpow.pop %v69
    %v71 = vmul.f32 %v68, 1.442695
    %v72 = vpow.pop %v71
    %v73 = vadd.f32 %v70, 1.0
    %v74 = vlog2.pop %v73
    %v75 = vmul.f32 %v74, 0.6931472
    %v76 = vmul.f32 -0.5, %v70
    %v77 = vadd.f32 %v76, 1.0
    %v78 = vmul.f32 %v77, %v70
    %v79 = vand.u32 2147483647, %v70
    %vm80 = vcmp.lt.f32.partialorder %v79, 0.0004427343
    %v81 = vsel %vm80, %v78, %v75
    %v82 = vadd.f32 %v72, 1.0
    %v83 = vlog2.pop %v82
    %v84 = vmul.f32 %v83, 0.6931472
    %v85 = vmul.f32 -0.5, %v72
    %v86 = vadd.f32 %v85, 1.0
    %v87 = vmul.f32 %v86, %v72
    %v88 = vand.u32 2147483647, %v72
    %vm89 = vcmp.lt.f32.partialorder %v88, 0.0004427343
    %v90 = vsel %vm89, %v87, %v84
    %v91 = vadd.f32 %v63, %v81
    %v92 = vadd.f32 %v64, %v90
    %v93 = vmul.f32 %v59, 2.0
    %v94 = vmul.f32 %v60, 2.0
    %v95 = vsub.f32 1.0, %v59
    %v96 = vsub.f32 1.0, %v60
    %v97 = vadd.f32 %v93, %v95
    %v98 = vadd.f32 %v94, %v96
    %v99 = vmul.f32 %v97, %v91
    %v100 = vmul.f32 %v98, %v92
    %v101 = vmul.f32 %v95, %v57
    %v102 = vmul.f32 %v96, %v58
    %v103 = vadd.f32 %v99, %v101
    %v104 = vadd.f32 %v100, %v102
    %v105 = vlaneseq
    %v106 = vand.u32 %v105, 127
    %vm107 = vcmp.lt.s32.totalorder %v106, 0
    %v108 = vsub.s32 0, %v106
    %v109 = vsel %vm107, %v108, %v106
    %v110 = vshrl.u32 %v109, 2
    %v111 = vand.u32 %v109, 3
    %v112 = vsub.s32 0, %v111
    %v113 = vsel %vm107, %v112, %v111
    %vm114 = vcmp.ne.s32.totalorder %v113, 0
    %vm115 = vcmp.lt.s32.totalorder %v113, 0
    %vm116 = vmand %vm115, %vm114
    %v117 = vadd.s32 %v113, 4
    %v118 = vsel %vm116, %v117, %v113
    %vm119 = vcmp.eq.s32.totalorder %v118, 3
    %vm120 = vcmp.gt.f32.partialorder %v59, 0.5
    %vm121 = vcmp.gt.f32.partialorder %v60, 0.5
    %v122 = vsel %vm119, 1, 0
    %vm123 = vcmp.eq.s32.totalorder %v122, 1
    %vm124 = vmand %vm123, %vm120
    %vm125 = vmand %vm123, %vm121
    %v126 = vsel %vm124, 1.0, 0.0
    %v127 = vsel %vm125, 1.0, 0.0
    %128 = vrot.lane.b32.xlu0 %v126, 127
    %v129 = vpop.permute.xlu0 %128
    %130 = vrot.lane.b32.xlu0 %v127, 127
    %v131 = vpop.permute.xlu0 %130
    %v132 = vadd.f32 %v126, %v129
    %v133 = vadd.f32 %v127, %v131
    %134 = vrot.lane.b32.xlu0 %v126, 126
    %v135 = vpop.permute.xlu0 %134
    %136 = vrot.lane.b32.xlu0 %v127, 126
    %v137 = vpop.permute.xlu0 %136
    %v138 = vadd.f32 %v132, %v135
    %v139 = vadd.f32 %v133, %v137
    %140 = vrot.lane.b32.xlu0 %v126, 125
    %v141 = vpop.permute.xlu0 %140
    %142 = vrot.lane.b32.xlu0 %v127, 125
    %v143 = vpop.permute.xlu0 %142
    %v144 = vadd.f32 %v138, %v141
    %v145 = vadd.f32 %v139, %v143
    %v146 = vsub.f32 %v57, %v59
    %v147 = vsub.f32 %v58, %v60
    %v148 = vmul.f32 %v146, %v146
    %v149 = vmul.f32 %v147, %v147
    %v150 = vmul.f32 %v148, %v144
    %v151 = vmul.f32 %v149, %v145
    %v152 = vld [vmem:[#allocation7] sm:$0x1]
    %v153 = vadd.f32 %v103, %v104
    %v154 = vrot.slane %v153, 4
    %v155 = vadd.f32 %v153, %v154
    %v156 = vrot.slane %v155, 2
    %v157 = vadd.f32 %v155, %v156
    %v158 = vrot.slane %v157, 1
    %v159 = vadd.f32 %v157, %v158
    %v160 = vadd.f32 %v152, %v159
    %161 = vst [vmem:[#allocation7] sm:$0x1] %v160
    %v162 = vld [vmem:[#allocation7 + $0x1] sm:$0x1]
    %v163 = vadd.f32 %v150, %v151
    %v164 = vrot.slane %v163, 4
    %v165 = vadd.f32 %v163, %v164
    %v166 = vrot.slane %v165, 2
    %v167 = vadd.f32 %v165, %v166
    %v168 = vrot.slane %v167, 1
    %v169 = vadd.f32 %v167, %v168
    %v170 = vadd.f32 %v162, %v169
    %171 = vst [vmem:[#allocation7 + $0x1] sm:$0x1] %v170
    %v172 = vld [vmem:[#allocation7 + $0x2] sm:$0x1]
    %v173 = vadd.f32 %v126, %v127
    %v174 = vrot.slane %v173, 4
    %v175 = vadd.f32 %v173, %v174
    %v176 = vrot.slane %v175, 2
    %v177 = vadd.f32 %v175, %v176
    %v178 = vrot.slane %v177, 1
    %v179 = vadd.f32 %v177, %v178
    %v180 = vadd.f32 %v172, %v179
    %181 = vst [vmem:[#allocation7 + $0x2] sm:$0x1] %v180
    // Predicated region
    $region22: #{tpu_custom_call.1} parent=1 // pred_check
      _
    $region23: #{tpu_custom_call.1} parent=1 // pred_check_branch
      %183 = sbr.rel (0) target = $region25
    $region24: #{tpu_custom_call.1} parent=1 // pred_region
      %s185 = ssub.s32 128, 128
      %186 = vsyncadd [#allocation4], %s185
      %s188 = sshll.u32 [#allocation7], 4
      %s189 = int_to_ptr.vmem [resolvable:$true] %s188
      %191 = dma.vmem_to_hbm [thread:$0]  %s189, 128, %s2, [#allocation4]
    $region25: #{tpu_custom_call.1} parent=1 // pred_fallthru
      _
    // Predicated region
    $region26: #{tpu_custom_call.1} parent=1 // pred_check
      _
    $region27: #{tpu_custom_call.1} parent=1 // pred_check_branch
      %193 = sbr.rel (0) target = $region29
    $region28: #{tpu_custom_call.1} parent=1 // pred_region
      %194 = dma.done [#allocation4], 128
    $region29: #{tpu_custom_call.1} parent=1 // pred_fallthru
      _
    %195 = vsyncpa [#allocation3], 1
    %196 = vsyncpa [#allocation6], 1
    %197 = vsyncpa [#allocation4], 1

</llo_original>
